<compile_context>
chip_gen: v7x
topology: tpu7x:2x2x1
jax: 0.10.0
libtpu: 0.0.40
codegen_flags: <defaults>
</compile_context>

<pallas_src>
import functools

import jax
import jax.numpy as jnp
from jax.experimental import pallas as pl
from jax.experimental.pallas import tpu as pltpu


def _rmsnorm_kernel(x_ref, w_ref, o_ref, *, eps):
    # x_ref: (TILE_ROWS, H) block of hidden_states
    # w_ref: (1, H) weight row, resident across the grid (constant index_map)
    # o_ref: (TILE_ROWS, H) output block, dtype = promote(weight, input)
    x = x_ref[...]
    input_dtype = x.dtype

    xf = x.astype(jnp.float32)
    variance = jnp.mean(xf * xf, axis=-1, keepdims=True)   # (TILE_ROWS, 1), f32
    normed = xf * jax.lax.rsqrt(variance + eps)             # f32

    # PyTorch: self.weight * hidden_states.to(input_dtype)
    #   -> cast normed back to input dtype first (quantization step), then
    #      multiply by the weight in its own dtype; jnp promotion matches torch.
    out = w_ref[...] * normed.astype(input_dtype)
    o_ref[...] = out.astype(o_ref.dtype)


def _choose_tile_rows(rows, H, in_itemsize, out_itemsize,
                      vmem_tile_budget=32 * 1024 * 1024, max_tile=1024):
    """Largest row tile (multiple of 8) whose double-buffered in+out blocks
    fit the VMEM budget, capped so the grid keeps >= 2 steps when possible."""
    per_row = 2 * (in_itemsize + out_itemsize) * H          # double-buffered bytes/row
    t = max(8, vmem_tile_budget // per_row)
    t = min(t, max_tile)
    t = min(t, ((rows + 7) // 8) * 8)                       # no point exceeding rows
    t = max(8, (t // 8) * 8)
    # Keep at least 2 grid steps so v7x's two TensorCores both get work.
    if t >= rows and rows > 8:
        half = (rows + 1) // 2
        t = max(8, ((half + 7) // 8) * 8)
    return t


def qwen2_rmsnorm(hidden_states, weight, eps=1e-6, tile_rows=None):
    """hidden_states: (..., H); weight: (H,).  Returns promote(weight, input) dtype,
    matching the PyTorch module's `weight * normed.to(input_dtype)`."""
    orig_shape = hidden_states.shape
    H = orig_shape[-1]
    x2d = hidden_states.reshape(-1, H)
    rows = x2d.shape[0]

    out_dtype = jnp.promote_types(weight.dtype, hidden_states.dtype)
    in_bytes = jnp.dtype(hidden_states.dtype).itemsize
    out_bytes = jnp.dtype(out_dtype).itemsize

    if tile_rows is None:
        tile_rows = _choose_tile_rows(rows, H, in_bytes, out_bytes)

    grid = pl.cdiv(rows, tile_rows)
    w2d = weight.reshape(1, H)

    out = pl.pallas_call(
        functools.partial(_rmsnorm_kernel, eps=eps),
        out_shape=jax.ShapeDtypeStruct((rows, H), out_dtype),
        grid_spec=pltpu.PrefetchScalarGridSpec(
            num_scalar_prefetch=0,
            grid=(grid,),
            in_specs=[
                pl.BlockSpec((tile_rows, H), lambda i: (i, 0)),
                pl.BlockSpec((1, H), lambda i: (0, 0)),   # weight stays resident
            ],
            out_specs=pl.BlockSpec((tile_rows, H), lambda i: (i, 0)),
        ),
        compiler_params=pltpu.CompilerParams(
            dimension_semantics=("parallel",),
            vmem_limit_bytes=48 * 1024 * 1024,   # fits v7x (64 MiB), raises v5e/v6e default
        ),
    )(x2d, w2d)

    return out.reshape(orig_shape)


def _reference(x, weight, eps):
    xf = x.astype(jnp.float32)
    var = jnp.mean(xf * xf, axis=-1, keepdims=True)
    normed = xf * jax.lax.rsqrt(var + eps)
    return weight * normed.astype(x.dtype)


if __name__ == "__main__":
    # Small, deterministic example consistent with the module's forward:
    # hidden_states of shape (batch, seq, hidden), hidden_size = 896 (module default).
    batch, seq, hidden = 2, 8, 896
    eps = 1e-6

    key = jax.random.PRNGKey(0)
    x_f32 = jax.random.normal(key, (batch, seq, hidden), dtype=jnp.float32)

    # nn.Parameter(torch.ones(hidden_size)) -> deterministic init of ones (f32).
    weight_f32 = jnp.ones((hidden,), dtype=jnp.float32)

    # --- f32 activations, f32 weight (exactly the PyTorch default module) ---
    out_f32 = jax.block_until_ready(qwen2_rmsnorm(x_f32, weight_f32, eps=eps))
    ref_f32 = _reference(x_f32, weight_f32, eps)
    assert out_f32.dtype == jnp.float32
    assert jnp.allclose(out_f32, ref_f32, atol=1e-5, rtol=1e-5), "f32 mismatch vs reference"

    # --- bf16 activations, bf16 weight (typical Qwen2 inference): bf16 output ---
    x_bf16 = x_f32.astype(jnp.bfloat16)
    weight_bf16 = weight_f32.astype(jnp.bfloat16)
    out_bf16 = jax.block_until_ready(qwen2_rmsnorm(x_bf16, weight_bf16, eps=eps))
    ref_bf16 = _reference(x_bf16, weight_bf16, eps)
    assert out_bf16.dtype == jnp.bfloat16
    assert jnp.allclose(out_bf16.astype(jnp.float32), ref_bf16.astype(jnp.float32),
                        atol=2e-2, rtol=2e-2), "bf16 mismatch vs reference"

    print("KERNEL_OK")
</pallas_src>

<mosaic_0001>
module attributes {stable_mosaic.version = 11 : i64} {
  func.func @_rmsnorm_kernel(%arg0: i32, %arg1: memref<8x896xf32, #tpu.memory_space<vmem>>, %arg2: memref<1x896xf32, #tpu.memory_space<vmem>>, %arg3: memref<8x896xf32, #tpu.memory_space<vmem>>) attributes {dimension_semantics = [#tpu.dimension_semantics<parallel>], iteration_bounds = array<i64: 2>, scalar_prefetch = 0 : i64, scratch_operands = 0 : i64, tpu.core_type = #tpu.core_type<tc>, window_params = [{transform_indices = @transform_0, window_bounds = array<i64: 8, 896>}, {pipeline_mode = #tpu.pipeline_mode<synchronous>, transform_indices = @transform_1, window_bounds = array<i64: 1, 896>}, {transform_indices = @transform_2, window_bounds = array<i64: 8, 896>}]} {
    %c0 = arith.constant 0 : index
    %c0_0 = arith.constant 0 : index
    %0 = vector.load %arg1[%c0, %c0_0] : memref<8x896xf32, #tpu.memory_space<vmem>>, vector<8x896xf32>
    %1 = arith.mulf %0, %0 : vector<8x896xf32>
    %cst = arith.constant dense<0.000000e+00> : vector<8xf32>
    %2 = vector.multi_reduction <add>, %1, %cst [1] : vector<8x896xf32> to vector<8xf32>
    %3 = vector.shape_cast %2 : vector<8xf32> to vector<8x1xf32>
    %cst_1 = arith.constant 8.960000e+02 : f32
    %4 = vector.broadcast %cst_1 : f32 to vector<8x1xf32>
    %5 = arith.divf %3, %4 : vector<8x1xf32>
    %cst_2 = arith.constant 9.99999997E-7 : f32
    %6 = vector.broadcast %cst_2 : f32 to vector<8x1xf32>
    %7 = arith.addf %5, %6 : vector<8x1xf32>
    %8 = math.rsqrt %7 : vector<8x1xf32>
    %9 = vector.broadcast %8 : vector<8x1xf32> to vector<8x896xf32>
    %10 = arith.mulf %0, %9 : vector<8x896xf32>
    %c0_3 = arith.constant 0 : index
    %c0_4 = arith.constant 0 : index
    %11 = vector.load %arg2[%c0_3, %c0_4] : memref<1x896xf32, #tpu.memory_space<vmem>>, vector<1x896xf32>
    %12 = vector.broadcast %11 : vector<1x896xf32> to vector<8x896xf32>
    %13 = arith.mulf %12, %10 : vector<8x896xf32>
    %c0_5 = arith.constant 0 : index
    %c0_6 = arith.constant 0 : index
    %14 = vector.load %arg3[%c0_5, %c0_6] : memref<8x896xf32, #tpu.memory_space<vmem>>, vector<8x896xf32>
    tpu.vector_store %arg3[%c0_5, %c0_6], %13 {strides = array<i32>} : memref<8x896xf32, #tpu.memory_space<vmem>>, vector<8x896xf32>,
    return
  }
  func.func @transform_0(%arg0: i32) -> (i32, i32) {
    %c0_i32 = arith.constant 0 : i32
    %c0_i32_0 = arith.constant 0 : i32
    return %arg0, %c0_i32 : i32, i32
  }
  func.func @transform_1(%arg0: i32) -> (i32, i32) {
    %c0_i32 = arith.constant 0 : i32
    %c0_i32_0 = arith.constant 0 : i32
    %c0_i32_1 = arith.constant 0 : i32
    return %c0_i32, %c0_i32_0 : i32, i32
  }
  func.func @transform_2(%arg0: i32) -> (i32, i32) {
    %c0_i32 = arith.constant 0 : i32
    %c0_i32_0 = arith.constant 0 : i32
    return %arg0, %c0_i32 : i32, i32
  }
}

</mosaic_0001>

<llo_original>
// kernel: tpu_custom_call.1
$region0: #{tpu_custom_call.1}
  #allocation0 [shape = 'u32[]', space=smem, size = 0x4, offset = 0x4, fixed_abs, tag = 'smem constant byte address 0x4 - core index']
  #allocation1 [shape = 'u32[144,128]{1,0:T(1,128)}', space=vmem, size = 0x12000, scoped, tag = 'internal scratch']
  %s0 = inlined_call_operand.hbm [shape: f32[16,896], index: 0, kind: input, shape index: {}]
  %s1 = inlined_call_operand.hbm [shape: f32[1,896], index: 1, kind: input, shape index: {}]
  %s2 = inlined_call_operand.hbm [shape: f32[16,896], index: 2, kind: output, shape index: {}]
  %s3 = sld [smem:[#allocation0]]
  $region49: #{tpu_custom_call.1} parent=0
    _
  %s5 = ssub.s32 1, %s3
  %s6 = scalar_select 0, %s5, %s3
  $region1: #{tpu_custom_call.1} parent=0
    #allocation2 [shape = 'u8[57344]{0}', space=vmem, size = 0xe000, scoped, tag = 'input window, operand 0']
    #allocation3 [shape = 's32[2]{0}', space=sflag, size = 0x8, scoped, tag = 'scoped memory for tpu_custom_call.1']
    #allocation4 [shape = 's32[2]{0}', space=sflag, size = 0x8, scoped, tag = 'scoped memory for tpu_custom_call.1']
    #allocation5 [shape = 'u8[3584]{0}', space=vmem, size = 0x1000, scoped, tag = 'input window, operand 1, single buffered']
    #allocation6 [shape = 's32[1]{0}', space=sflag, size = 0x4, scoped, tag = 'scoped memory for tpu_custom_call.1']
    #allocation7 [shape = 'u8[57344]{0}', space=vmem, size = 0xe000, scoped, tag = 'output window, operand 0']
    %7 = vsyncpa [#allocation3], 0
    %s8 = scalar_lea.sflag [#allocation3], 1
    %9 = vsyncpa %s8, 0
    %10 = vsyncpa [#allocation6], 0
    %11 = vsyncpa [#allocation4], 0
    %s12 = scalar_lea.sflag [#allocation4], 1
    %13 = vsyncpa %s12, 0
    loop: start=0, step=1, limit=4
    $region2: #{tpu_custom_call.1} parent=1 // loop_pre_header
      _
    $region3: #{tpu_custom_call.1} parent=1 // loop_header
      %s15 = sphi 0, %s19
      %p16 = scmp.ge.s32.totalorder %s15, 4
      %s25 = sphi 0, %s27
      %s28 = sphi 0, %s25
      %s29 = sphi 0, %s28
      %s45 = sphi 0, %s29
      %s49 = sphi 0, %s49
      %s51 = sphi 0, %s49
      %s52 = sphi 0, %s51
      %s66 = sphi 0, %s52
      %s72 = sphi 0, %s74
      %s75 = sphi 0, %s72
      %s76 = sphi 0, %s75
      %s92 = sphi 0, %s76
    $region4: #{tpu_custom_call.1} parent=1 // loop_header_branch
      %18 = sbr.rel (%p16) target = $region8
    $region5: #{tpu_custom_call.1} parent=1 // loop_body
      %s20 = ssub.s32 %s15, 1
      %s21 = ssub.s32 %s15, 2
      %s22 = sadd.s32 %s15, 1
      %s23 = ssub.s32 %s15, %s22
      %p24 = scmp.eq.s32.totalorder %s23, 0
      %s26 = sadd.s32 %s25, 1
      %s27 = scalar_select %p24, %s25, %s26
      %p30 = pneg %p24
      %p31 = scmp.eq.s32.totalorder %s15, 1
      %p32 = por %p30, %p31
      %p33 = scmp.ne.s32.totalorder %s25, %s28
      %p34 = scmp.eq.s32.totalorder %s15, 0
      %p35 = por %p33, %p34
      %p36 = scmp.ne.s32.totalorder %s25, %s28
      %p37 = scmp.eq.s32.totalorder %s20, 1
      %p38 = por %p36, %p37
      %p39 = scmp.ne.s32.totalorder %s28, %s29
      %p40 = scmp.eq.s32.totalorder %s20, 0
      %p41 = por %p39, %p40
      %p42 = scmp.ne.s32.totalorder %s28, %s29
      %p43 = scmp.eq.s32.totalorder %s21, 1
      %p44 = por %p42, %p43
      %p46 = scmp.ne.s32.totalorder %s29, %s45
      %p47 = scmp.eq.s32.totalorder %s21, 0
      %p48 = por %p46, %p47
      %s50 = sadd.s32 %s49, 1
      %p53 = scmp.eq.s32.totalorder %s15, 1
      %p54 = scmp.ne.s32.totalorder %s49, %s51
      %p55 = scmp.eq.s32.totalorder %s15, 0
      %p56 = por %p54, %p55
      %p57 = scmp.ne.s32.totalorder %s49, %s51
      %p58 = scmp.eq.s32.totalorder %s20, 1
      %p59 = por %p57, %p58
      %p60 = scmp.ne.s32.totalorder %s51, %s52
      %p61 = scmp.eq.s32.totalorder %s20, 0
      %p62 = por %p60, %p61
      %p63 = scmp.ne.s32.totalorder %s51, %s52
      %p64 = scmp.eq.s32.totalorder %s21, 1
      %p65 = por %p63, %p64
      %p67 = scmp.ne.s32.totalorder %s52, %s66
      %p68 = scmp.eq.s32.totalorder %s21, 0
      %p69 = por %p67, %p68
      %s70 = ssub.s32 %s15, %s22
      %p71 = scmp.eq.s32.totalorder %s70, 0
      %s73 = sadd.s32 %s72, 1
      %s74 = scalar_select %p71, %s72, %s73
      %p77 = pneg %p71
      %p78 = scmp.eq.s32.totalorder %s15, 1
      %p79 = por %p77, %p78
      %p80 = scmp.ne.s32.totalorder %s72, %s75
      %p81 = scmp.eq.s32.totalorder %s15, 0
      %p82 = por %p80, %p81
      %p83 = scmp.ne.s32.totalorder %s72, %s75
      %p84 = scmp.eq.s32.totalorder %s20, 1
      %p85 = por %p83, %p84
      %p86 = scmp.ne.s32.totalorder %s75, %s76
      %p87 = scmp.eq.s32.totalorder %s20, 0
      %p88 = por %p86, %p87
      %p89 = scmp.ne.s32.totalorder %s75, %s76
      %p90 = scmp.eq.s32.totalorder %s21, 1
      %p91 = por %p89, %p90
      %p93 = scmp.ne.s32.totalorder %s76, %s92
      %p94 = scmp.eq.s32.totalorder %s21, 0
      %p95 = por %p93, %p94
      %p96 = scmp.le.s32.totalorder 1, %s15
      %p97 = scmp.lt.s32.totalorder %s15, 3
      %p98 = pnand %p96, %p97
      %p99 = pneg %p98
      // Predicated region
      $region9: #{tpu_custom_call.1} parent=5 // pred_check
        _
      $region10: #{tpu_custom_call.1} parent=5 // pred_check_branch
        %101 = sbr.rel (%p98) target = $region12
      $region11: #{tpu_custom_call.1} parent=5 // pred_region
        %s102 = ssub.s32 %s15, 1
        // Predicated region
        $region13: #{tpu_custom_call.1} parent=11 // pred_check
          %p103 = pneg %p62
        $region14: #{tpu_custom_call.1} parent=11 // pred_check_branch
          %105 = sbr.rel (%p103) target = $region16
        $region15: #{tpu_custom_call.1} parent=11 // pred_region
          %s107 = ssub.s32 112, 112
          %108 = vsyncadd [#allocation6], %s107
          %s110 = sshll.u32 [#allocation5], 4
          %s111 = int_to_ptr.vmem [resolvable:$true] %s110
          %113 = dma.hbm_to_vmem [thread:$0]  %s1, 112, %s111, [#allocation6]
        $region16: #{tpu_custom_call.1} parent=11 // pred_fallthru
          _
      $region12: #{tpu_custom_call.1} parent=5 // pred_fallthru
        _
      %p114 = scmp.lt.s32.totalorder %s15, 2
      // Predicated region
      $region17: #{tpu_custom_call.1} parent=5 // pred_check
        %p115 = pneg %p114
      $region18: #{tpu_custom_call.1} parent=5 // pred_check_branch
        %117 = sbr.rel (%p115) target = $region20
      $region19: #{tpu_custom_call.1} parent=5 // pred_region
        // Predicated region
        $region21: #{tpu_custom_call.1} parent=19 // pred_check
          %p118 = pneg %p35
        $region22: #{tpu_custom_call.1} parent=19 // pred_check_branch
          %120 = sbr.rel (%p118) target = $region24
        $region23: #{tpu_custom_call.1} parent=19 // pred_region
          %s121 = sand.u32 %s25, 1
          %s122 = scalar_lea.sflag [#allocation3], %s121
          %s123 = sand.u32 %s25, 1
          %s124 = smul.addr %s123, 56
          %s125 = scalar_lea.vmem [#allocation2], %s124
          %s127 = ssub.s32 896, 896
          %128 = vsyncadd %s122, %s127
          %s129 = smul.addr %s15, 7
          %s130 = smul.addr %s129, 128
          %s131 = scalar_lea.hbm %s0, %s130
          %s133 = sshll.u32 %s125, 4
          %s134 = int_to_ptr.vmem [resolvable:$true] %s133
          %136 = dma.hbm_to_vmem [thread:$0]  %s131, 896, %s134, %s122
        $region24: #{tpu_custom_call.1} parent=19 // pred_fallthru
          _
      $region20: #{tpu_custom_call.1} parent=5 // pred_fallthru
        _
      %p137 = scmp.le.s32.totalorder 1, %s15
      %p138 = scmp.lt.s32.totalorder %s15, 3
      %p139 = pnand %p137, %p138
      %p140 = pneg %p139
      // Predicated region
      $region25: #{tpu_custom_call.1} parent=5 // pred_check
        _
      $region26: #{tpu_custom_call.1} parent=5 // pred_check_branch
        %142 = sbr.rel (%p139) target = $region28
      $region27: #{tpu_custom_call.1} parent=5 // pred_region
        %s143 = ssub.s32 %s15, 1
        %s144 = sand.u32 %s28, 1
        %s145 = scalar_lea.sflag [#allocation3], %s144
        %s146 = sand.u32 %s28, 1
        %s147 = smul.addr %s146, 56
        %s148 = scalar_lea.vmem [#allocation2], %s147
        // Predicated region
        $region29: #{tpu_custom_call.1} parent=27 // pred_check
          %p149 = pneg %p41
        $region30: #{tpu_custom_call.1} parent=27 // pred_check_branch
          %151 = sbr.rel (%p149) target = $region32
        $region31: #{tpu_custom_call.1} parent=27 // pred_region
          %152 = dma.done %s145, 896
        $region32: #{tpu_custom_call.1} parent=27 // pred_fallthru
          _
        // Predicated region
        $region33: #{tpu_custom_call.1} parent=27 // pred_check
          %p153 = pneg %p62
        $region34: #{tpu_custom_call.1} parent=27 // pred_check_branch
          %155 = sbr.rel (%p153) target = $region36
        $region35: #{tpu_custom_call.1} parent=27 // pred_region
          %156 = dma.done [#allocation6], 112
        $region36: #{tpu_custom_call.1} parent=27 // pred_fallthru
          _
        %s157 = sand.u32 %s28, 1
        %s158 = scalar_lea.sflag [#allocation3], %s157
        %s159 = sand.u32 %s28, 1
        %s160 = smul.addr %s159, 56
        %s161 = scalar_lea.vmem [#allocation2], %s160
        %p162 = pneg %p41
        %p163 = pneg %p38
        %p164 = pneg %p62
        %p165 = pneg %p59
        %p166 = pneg %p88
        %p167 = pneg %p85
        %s168 = sand.u32 %s75, 1
        %s169 = scalar_lea.sflag [#allocation4], %s168
        %s170 = sand.u32 %s75, 1
        %s171 = smul.addr %s170, 56
        %s172 = scalar_lea.vmem [#allocation7], %s171
        %v173 = vld [vmem:[%s148] sm:$0xff]
        %v174 = vld [vmem:[%s148 + $0x8] sm:$0xff]
        %v175 = vld [vmem:[%s148 + $0x10] sm:$0xff]
        %v176 = vld [vmem:[%s148 + $0x18] sm:$0xff]
        %v177 = vld [vmem:[%s148 + $0x20] sm:$0xff]
        %v178 = vld [vmem:[%s148 + $0x28] sm:$0xff]
        %v179 = vld [vmem:[%s148 + $0x30] sm:$0xff]
        %v180 = vmul.f32 %v173, %v173
        %v181 = vmul.f32 %v174, %v174
        %v182 = vmul.f32 %v175, %v175
        %v183 = vmul.f32 %v176, %v176
        %v184 = vmul.f32 %v177, %v177
        %v185 = vmul.f32 %v178, %v178
        %v186 = vmul.f32 %v179, %v179
        %v187 = vadd.f32 %v180, %v181
        %v188 = vadd.f32 %v187, %v182
        %v189 = vadd.f32 %v188, %v183
        %v190 = vadd.f32 %v189, %v184
        %v191 = vadd.f32 %v190, %v185
        %v192 = vadd.f32 %v191, %v186
        %193 = vadd.xlane.f32.xlu0 %v192
        %v194 = vpop.xlane.xlu0 %193
        %v195 = vrcp.pop 896.0
        %v196 = vmul.f32 %v194, %v195
        %v197 = vadd.f32 %v196, 1e-06
        %v198 = vrsqrt.pop %v197
        %v199 = vmul.f32 %v173, %v198
        %v200 = vmul.f32 %v174, %v198
        %v201 = vmul.f32 %v175, %v198
        %v202 = vmul.f32 %v176, %v198
        %v203 = vmul.f32 %v177, %v198
        %v204 = vmul.f32 %v178, %v198
        %v205 = vmul.f32 %v179, %v198
        %v206 = vld [vmem:[#allocation5] sm:$0xff]
        %v208 = vlaneseq
        %v209 = vshrl.u32 %v208, 7
        %v210 = vsub.s32 0, %v209
        %v211 = vrot.slane %v206, %v210
        %v212 = vlaneseq
        %v213 = vshrl.u32 %v212, 7
        %v214 = vsub.s32 1, %v213
        %v215 = vrot.slane %v206, %v214
        %v216 = vlaneseq
        %v217 = vshrl.u32 %v216, 7
        %v218 = vsub.s32 2, %v217
        %v219 = vrot.slane %v206, %v218
        %v220 = vlaneseq
        %v221 = vshrl.u32 %v220, 7
        %v222 = vsub.s32 3, %v221
        %v223 = vrot.slane %v206, %v222
        %v224 = vlaneseq
        %v225 = vshrl.u32 %v224, 7
        %v226 = vsub.s32 4, %v225
        %v227 = vrot.slane %v206, %v226
        %v228 = vlaneseq
        %v229 = vshrl.u32 %v228, 7
        %v230 = vsub.s32 5, %v229
        %v231 = vrot.slane %v206, %v230
        %v232 = vlaneseq
        %v233 = vshrl.u32 %v232, 7
        %v234 = vsub.s32 6, %v233
        %v235 = vrot.slane %v206, %v234
        %v243 = vmul.f32 %v211, %v199
        %v244 = vmul.f32 %v215, %v200
        %v245 = vmul.f32 %v219, %v201
        %v246 = vmul.f32 %v223, %v202
        %v247 = vmul.f32 %v227, %v203
        %v248 = vmul.f32 %v231, %v204
        %v249 = vmul.f32 %v235, %v205
        %250 = vst [vmem:[%s172] sm:$0xff] %v243
        %251 = vst [vmem:[%s172 + $0x8] sm:$0xff] %v244
        %252 = vst [vmem:[%s172 + $0x10] sm:$0xff] %v245
        %253 = vst [vmem:[%s172 + $0x18] sm:$0xff] %v246
        %254 = vst [vmem:[%s172 + $0x20] sm:$0xff] %v247
        %255 = vst [vmem:[%s172 + $0x28] sm:$0xff] %v248
        %256 = vst [vmem:[%s172 + $0x30] sm:$0xff] %v249
        %s257 = sand.u32 %s75, 1
        %s258 = scalar_lea.sflag [#allocation4], %s257
        %s259 = sand.u32 %s75, 1
        %s260 = smul.addr %s259, 56
        %s261 = scalar_lea.vmem [#allocation7], %s260
        // Predicated region
        $region37: #{tpu_custom_call.1} parent=27 // pred_check
          %p262 = pneg %p85
        $region38: #{tpu_custom_call.1} parent=27 // pred_check_branch
          %264 = sbr.rel (%p262) target = $region40
        $region39: #{tpu_custom_call.1} parent=27 // pred_region
          %s266 = ssub.s32 896, 896
          %267 = vsyncadd %s258, %s266
          %s268 = smul.addr %s20, 7
          %s269 = smul.addr %s268, 128
          %s270 = scalar_lea.hbm %s2, %s269
          %s272 = sshll.u32 %s261, 4
          %s273 = int_to_ptr.vmem [resolvable:$true] %s272
          %275 = dma.vmem_to_hbm [thread:$0]  %s273, 896, %s270, %s258
        $region40: #{tpu_custom_call.1} parent=27 // pred_fallthru
          _
      $region28: #{tpu_custom_call.1} parent=5 // pred_fallthru
        _
      %p276 = scmp.le.s32.totalorder 2, %s15
      // Predicated region
      $region41: #{tpu_custom_call.1} parent=5 // pred_check
        %p277 = pneg %p276
      $region42: #{tpu_custom_call.1} parent=5 // pred_check_branch
        %279 = sbr.rel (%p277) target = $region44
      $region43: #{tpu_custom_call.1} parent=5 // pred_region
        %s280 = ssub.s32 %s15, 2
        // Predicated region
        $region45: #{tpu_custom_call.1} parent=43 // pred_check
          %p281 = pneg %p91
        $region46: #{tpu_custom_call.1} parent=43 // pred_check_branch
          %283 = sbr.rel (%p281) target = $region48
        $region47: #{tpu_custom_call.1} parent=43 // pred_region
          %s284 = sand.u32 %s76, 1
          %s285 = scalar_lea.sflag [#allocation4], %s284
          %s286 = sand.u32 %s76, 1
          %s287 = smul.addr %s286, 56
          %s288 = scalar_lea.vmem [#allocation7], %s287
          %289 = dma.done %s285, 896
        $region48: #{tpu_custom_call.1} parent=43 // pred_fallthru
          _
      $region44: #{tpu_custom_call.1} parent=5 // pred_fallthru
        _
    $region6: #{tpu_custom_call.1} parent=1 // loop_footer
      %s19 = sadd.s32 1, %s15
    $region7: #{tpu_custom_call.1} parent=1 // loop_footer_branch
      %14 = sbr.rel target = $region3
    $region8: #{tpu_custom_call.1} parent=1 // loop_exit
      _
    %290 = vsyncpa [#allocation3], 1
    %s291 = scalar_lea.sflag [#allocation3], 1
    %292 = vsyncpa %s291, 1
    %293 = vsyncpa [#allocation6], 1
    %294 = vsyncpa [#allocation4], 1
    %s295 = scalar_lea.sflag [#allocation4], 1
    %296 = vsyncpa %s295, 1

</llo_original>
